<compile_context>
chip_gen: v7x
topology: tpu7x:2x2x1
jax: 0.10.0
libtpu: 0.0.40
codegen_flags: <defaults>
</compile_context>

<pallas_src>
import jax
import jax.numpy as jnp
from jax.experimental import pallas as pl
from jax.experimental.pallas import tpu as pltpu

location_mapping = {'Tubulin': 0, 'Actin': 1, 'Mitochondria': 2}
NUM_LOC = len(location_mapping)          # 3
HIDDEN = 32
PACKED_ROWS = NUM_LOC + 1 + HIDDEN + 1   # 37  (w1 | b1 | w2 | b2)


# ------------------------------ param packing --------------------------------
def pack_loc_mlp_params(w1, b1, w2, b2):
    """Pack (w1 [3,32], b1 [32], w2 [32,32], b2 [32]) into one [37,32] buffer.

    If loading real PyTorch nn.Linear weights ([out,in]), transpose them to
    [in,out] before calling this.
    """
    return jnp.concatenate(
        [w1.astype(jnp.float32),
         b1.reshape(1, HIDDEN).astype(jnp.float32),
         w2.astype(jnp.float32),
         b2.reshape(1, HIDDEN).astype(jnp.float32)],
        axis=0,
    )


# ------------------------------- Pallas kernel -------------------------------
def _loc_mlp_kernel(x_ref, p_ref, o_ref):
    # x: [tb, 3] f32 ; p: [37, 32] f32 packed params ; o: [tb, 32] f32
    x = x_ref[...].astype(jnp.float32)
    p = p_ref[...]
    w1 = p[0:NUM_LOC, :]                                   # [3, 32]
    b1 = p[NUM_LOC:NUM_LOC + 1, :]                         # [1, 32]
    w2 = p[NUM_LOC + 1:NUM_LOC + 1 + HIDDEN, :]            # [32, 32]
    b2 = p[NUM_LOC + 1 + HIDDEN:PACKED_ROWS, :]            # [1, 32]

    # First layer on the VPU: K=3 contraction expressed as 3 broadcast FMAs
    # (avoids an MXU push/drain for a 3-wide systolic contraction).
    h = b1 + x[:, 0:1] * w1[0:1, :]
    h = h + x[:, 1:2] * w1[1:2, :]
    h = h + x[:, 2:3] * w1[2:3, :]
    h = jnp.maximum(h, 0.0)                                # ReLU

    # Second layer (32x32) on the MXU, f32 accumulation.
    y = jnp.dot(h, w2, preferred_element_type=jnp.float32) + b2
    o_ref[...] = y.astype(o_ref.dtype)
    # TODO(synk): output last-dim is 32 (< 128) so stores are masked vst.msk;
    # a lane-dense [B//4, 128] repack would help at very large B but changes
    # the in-kernel layout — not worth the risk/complexity at this size.


def loc_embedding_pallas(x, packed_params, *, tile_b=512):
    """Linear(3->32) -> ReLU -> Linear(32->32) on TPU via one Pallas kernel.

    x:             [B, 3]  float32
    packed_params: [37, 32] float32 (see pack_loc_mlp_params)
    returns        [B, 32] float32
    """
    B = x.shape[0]
    flops = 2 * B * (NUM_LOC * HIDDEN + HIDDEN * HIDDEN)
    bytes_accessed = B * (NUM_LOC + HIDDEN) * 4 + PACKED_ROWS * HIDDEN * 4
    cost = pl.CostEstimate(flops=flops, transcendentals=0,
                           bytes_accessed=bytes_accessed)
    out_shape = jax.ShapeDtypeStruct((B, HIDDEN), jnp.float32)

    if B <= tile_b:
        # Small batch: single grid step, full-array blocks (block_shape ==
        # array shape satisfies the (8,128) tiling constraint for any B).
        full = lambda shape: pl.BlockSpec(shape, lambda: tuple(0 for _ in shape))
        return pl.pallas_call(
            _loc_mlp_kernel,
            out_shape=out_shape,
            grid_spec=pltpu.PrefetchScalarGridSpec(
                num_scalar_prefetch=0,
                grid=(),
                in_specs=[full((B, NUM_LOC)), full((PACKED_ROWS, HIDDEN))],
                out_specs=full((B, HIDDEN)),
            ),
            cost_estimate=cost,
        )(x, packed_params)

    # Large batch: tile the row dimension; feature dims stay full-extent.
    # "parallel" lets multi-TensorCore chips shard the batch axis.
    tile_b = max(8, (tile_b // 8) * 8)          # keep sublane-aligned tiles
    grid = (pl.cdiv(B, tile_b),)
    return pl.pallas_call(
        _loc_mlp_kernel,
        out_shape=out_shape,
        grid_spec=pltpu.PrefetchScalarGridSpec(
            num_scalar_prefetch=0,
            grid=grid,
            in_specs=[
                pl.BlockSpec((tile_b, NUM_LOC), lambda i: (i, 0)),
                # Constant index_map: packed params fetched once, stay resident.
                pl.BlockSpec((PACKED_ROWS, HIDDEN), lambda i: (0, 0)),
            ],
            out_specs=pl.BlockSpec((tile_b, HIDDEN), lambda i: (i, 0)),
        ),
        compiler_params=pltpu.CompilerParams(
            dimension_semantics=("parallel",)),
        cost_estimate=cost,
    )(x, packed_params)


# --------------------------- Module re-implementation ------------------------
class BFClassEmbedderJAX:
    def __init__(self, include_location=True, include_ref_image=False,
                 include_bf_mode=True, use_loc_embedding=True, key=None):
        self.include_location = include_location
        self.include_ref_image = include_ref_image
        self.include_bf_mode = include_bf_mode
        self.use_loc_embedding = use_loc_embedding
        if self.use_loc_embedding:
            key = jax.random.PRNGKey(42) if key is None else key
            k1, k2, k3, k4 = jax.random.split(key, 4)
            # nn.Linear default init ~ U(-1/sqrt(fan_in), 1/sqrt(fan_in)).
            lim1 = 1.0 / jnp.sqrt(float(NUM_LOC))
            lim2 = 1.0 / jnp.sqrt(float(HIDDEN))
            self.w1 = jax.random.uniform(k1, (NUM_LOC, HIDDEN), jnp.float32, -lim1, lim1)
            self.b1 = jax.random.uniform(k2, (HIDDEN,), jnp.float32, -lim1, lim1)
            self.w2 = jax.random.uniform(k3, (HIDDEN, HIDDEN), jnp.float32, -lim2, lim2)
            self.b2 = jax.random.uniform(k4, (HIDDEN,), jnp.float32, -lim2, lim2)
            # Pack once at init so every forward pass ships 2 inputs, not 5.
            self.packed_params = pack_loc_mlp_params(self.w1, self.b1, self.w2, self.b2)
        # TODO(synk): image_embedding_model is instantiated from an external
        # config (instantiate_from_config); its encode()/decode() have no
        # architecture available here, so include_ref_image / decode are not
        # reproducible in this script.

    def forward(self, batch, key=None):
        conditions = dict()
        embed = []
        if self.include_bf_mode:
            embed.append(batch['BF_mode'])
        if self.include_location:
            if self.use_loc_embedding:
                embed.append(
                    loc_embedding_pallas(batch['location_classes'],
                                         self.packed_params))
            else:
                embed.append(batch['location_classes'])
        if 'densent_avg' in batch:
            embed.append(batch['densent_avg'])
        if embed:
            conditions['c_crossattn'] = embed
        if self.include_ref_image:
            # TODO(synk): requires external image_embedding_model.encode(); skipped.
            raise NotImplementedError("image_embedding_model not available")
        return conditions


# ------------------------------------ main ------------------------------------
if __name__ == "__main__":
    key = jax.random.PRNGKey(0)
    k_loc, k_mode, k_dense, k_big = jax.random.split(key, 4)

    B = 8
    # one-hot location classes over {Tubulin, Actin, Mitochondria}
    loc_idx = jax.random.randint(k_loc, (B,), 0, NUM_LOC)
    location_classes = jax.nn.one_hot(loc_idx, NUM_LOC, dtype=jnp.float32)   # [B, 3]
    bf_mode = jax.random.normal(k_mode, (B, 4), dtype=jnp.float32)           # [B, 4]
    densent_avg = jax.random.normal(k_dense, (B, 16), dtype=jnp.float32)     # [B, 16]

    batch = {
        'location_classes': location_classes,
        'BF_mode': bf_mode,
        'densent_avg': densent_avg,
    }

    embedder = BFClassEmbedderJAX(include_location=True,
                                  include_ref_image=False,
                                  include_bf_mode=True,
                                  use_loc_embedding=True)

    conditions = embedder.forward(batch)
    c_crossattn = conditions['c_crossattn']
    for t in c_crossattn:
        jax.block_until_ready(t)

    # Sanity check the Pallas MLP against a plain-JAX reference.
    def ref_mlp(x):
        return (jnp.maximum(x @ embedder.w1 + embedder.b1, 0.0)
                @ embedder.w2 + embedder.b2)

    loc_emb = c_crossattn[1]
    assert loc_emb.shape == (B, HIDDEN)
    assert jnp.allclose(loc_emb, ref_mlp(location_classes), atol=1e-5, rtol=1e-5)

    # Also exercise the batch-tiled (large-B / parallel) path with a tiny tile.
    B_big = 16
    x_big = jax.random.normal(k_big, (B_big, NUM_LOC), dtype=jnp.float32)
    out_big = loc_embedding_pallas(x_big, embedder.packed_params, tile_b=8)
    jax.block_until_ready(out_big)
    assert out_big.shape == (B_big, HIDDEN)
    assert jnp.allclose(out_big, ref_mlp(x_big), atol=1e-5, rtol=1e-5)

    print("KERNEL_OK")
</pallas_src>

<mosaic_0001>
module attributes {stable_mosaic.version = 11 : i64} {
  func.func @_loc_mlp_kernel(%arg0: memref<8x3xf32, #tpu.memory_space<vmem>>, %arg1: memref<37x32xf32, #tpu.memory_space<vmem>>, %arg2: memref<8x32xf32, #tpu.memory_space<vmem>>) attributes {dimension_semantics = [], scalar_prefetch = 0 : i64, scratch_operands = 0 : i64, tpu.core_type = #tpu.core_type<tc>} {
    %c0 = arith.constant 0 : index
    %c0_0 = arith.constant 0 : index
    %0 = vector.load %arg0[%c0, %c0_0] : memref<8x3xf32, #tpu.memory_space<vmem>>, vector<8x3xf32>
    %c0_1 = arith.constant 0 : index
    %c0_2 = arith.constant 0 : index
    %1 = vector.load %arg1[%c0_1, %c0_2] : memref<37x32xf32, #tpu.memory_space<vmem>>, vector<37x32xf32>
    %2 = vector.extract_strided_slice %1 {offsets = [0, 0], sizes = [3, 32], strides = [1, 1]} : vector<37x32xf32> to vector<3x32xf32>
    %3 = vector.extract_strided_slice %1 {offsets = [3, 0], sizes = [1, 32], strides = [1, 1]} : vector<37x32xf32> to vector<1x32xf32>
    %4 = vector.extract_strided_slice %1 {offsets = [4, 0], sizes = [32, 32], strides = [1, 1]} : vector<37x32xf32> to vector<32x32xf32>
    %5 = vector.extract_strided_slice %1 {offsets = [36, 0], sizes = [1, 32], strides = [1, 1]} : vector<37x32xf32> to vector<1x32xf32>
    %6 = vector.extract_strided_slice %0 {offsets = [0, 0], sizes = [8, 1], strides = [1, 1]} : vector<8x3xf32> to vector<8x1xf32>
    %7 = vector.extract_strided_slice %2 {offsets = [0, 0], sizes = [1, 32], strides = [1, 1]} : vector<3x32xf32> to vector<1x32xf32>
    %8 = vector.broadcast %6 : vector<8x1xf32> to vector<8x32xf32>
    %9 = vector.broadcast %7 : vector<1x32xf32> to vector<8x32xf32>
    %10 = arith.mulf %8, %9 : vector<8x32xf32>
    %11 = vector.broadcast %3 : vector<1x32xf32> to vector<8x32xf32>
    %12 = arith.addf %11, %10 : vector<8x32xf32>
    %13 = vector.extract_strided_slice %0 {offsets = [0, 1], sizes = [8, 1], strides = [1, 1]} : vector<8x3xf32> to vector<8x1xf32>
    %14 = vector.extract_strided_slice %2 {offsets = [1, 0], sizes = [1, 32], strides = [1, 1]} : vector<3x32xf32> to vector<1x32xf32>
    %15 = vector.broadcast %13 : vector<8x1xf32> to vector<8x32xf32>
    %16 = vector.broadcast %14 : vector<1x32xf32> to vector<8x32xf32>
    %17 = arith.mulf %15, %16 : vector<8x32xf32>
    %18 = arith.addf %12, %17 : vector<8x32xf32>
    %19 = vector.extract_strided_slice %0 {offsets = [0, 2], sizes = [8, 1], strides = [1, 1]} : vector<8x3xf32> to vector<8x1xf32>
    %20 = vector.extract_strided_slice %2 {offsets = [2, 0], sizes = [1, 32], strides = [1, 1]} : vector<3x32xf32> to vector<1x32xf32>
    %21 = vector.broadcast %19 : vector<8x1xf32> to vector<8x32xf32>
    %22 = vector.broadcast %20 : vector<1x32xf32> to vector<8x32xf32>
    %23 = arith.mulf %21, %22 : vector<8x32xf32>
    %24 = arith.addf %18, %23 : vector<8x32xf32>
    %cst = arith.constant 0.000000e+00 : f32
    %25 = vector.broadcast %cst : f32 to vector<8x32xf32>
    %26 = arith.maximumf %24, %25 : vector<8x32xf32>
    %cst_3 = arith.constant dense<0.000000e+00> : vector<8x32xf32>
    %27 = tpu.matmul %26, %4, %cst_3 {dimension_numbers = #tpu.dot_dimension_numbers<[1], [0], [0], [1], [0, 0, 1, 1], [], []>} : vector<8x32xf32>, vector<32x32xf32>, vector<8x32xf32> -> vector<8x32xf32>
    %28 = vector.broadcast %5 : vector<1x32xf32> to vector<8x32xf32>
    %29 = arith.addf %27, %28 : vector<8x32xf32>
    %c0_4 = arith.constant 0 : index
    %c0_5 = arith.constant 0 : index
    %30 = vector.load %arg2[%c0_4, %c0_5] : memref<8x32xf32, #tpu.memory_space<vmem>>, vector<8x32xf32>
    tpu.vector_store %arg2[%c0_4, %c0_5], %29 {strides = array<i32>} : memref<8x32xf32, #tpu.memory_space<vmem>>, vector<8x32xf32>,
    return
  }
}

</mosaic_0001>

<llo_original>
// kernel: tpu_custom_call.1
$region0: #{tpu_custom_call.1}
  #allocation0 [shape = 'u32[]', space=smem, size = 0x4, offset = 0x4, fixed_abs, tag = 'smem constant byte address 0x4 - core index']
  #allocation1 [shape = 'u32[144,128]{1,0:T(1,128)}', space=vmem, size = 0x12000, scoped, tag = 'internal scratch']
  %s0 = inlined_call_operand.vmem [shape: f32[8,3], index: 0, kind: input, shape index: {}]
  %s1 = inlined_call_operand.vmem [shape: f32[37,32], index: 1, kind: input, shape index: {}]
  %s2 = inlined_call_operand.hbm [shape: f32[8,32], index: 2, kind: output, shape index: {}]
  %s3 = sld [smem:[#allocation0]]
  $region18: #{tpu_custom_call.1} parent=0
    _
  %s5 = ssub.s32 1, %s3
  %s6 = scalar_select 0, %s5, %s3
  $region1: #{tpu_custom_call.1} parent=0
    #allocation2 [shape = 'u8[4096]{0}', space=vmem, size = 0x1000, scoped, tag = 'output window, operand 0, single buffered']
    #allocation3 [shape = 's32[1]{0}', space=sflag, size = 0x4, scoped, tag = 'scoped memory for tpu_custom_call.1']
    %7 = vsyncpa [#allocation3], 0
    // Predicated region
    $region2: #{tpu_custom_call.1} parent=1 // pred_check
      _
    $region3: #{tpu_custom_call.1} parent=1 // pred_check_branch
      %9 = sbr.rel (0) target = $region5
    $region4: #{tpu_custom_call.1} parent=1 // pred_region
      _
    $region5: #{tpu_custom_call.1} parent=1 // pred_fallthru
      _
    // Predicated region
    $region6: #{tpu_custom_call.1} parent=1 // pred_check
      _
    $region7: #{tpu_custom_call.1} parent=1 // pred_check_branch
      %11 = sbr.rel (0) target = $region9
    $region8: #{tpu_custom_call.1} parent=1 // pred_region
      _
    $region9: #{tpu_custom_call.1} parent=1 // pred_fallthru
      _
    %v12 = vld [vmem:[%s0] sm:$0xff]
    %v13 = vld [vmem:[%s1] sm:$0xff]
    %v14 = vld [vmem:[%s1 + $0x8] sm:$0xff]
    %v15 = vld [vmem:[%s1 + $0x10] sm:$0xff]
    %v16 = vld [vmem:[%s1 + $0x18] sm:$0xff]
    %v17 = vld [vmem:[%s1 + $0x20] sm:$0x1f]
    %19 = vset.pattern.permute.xlu0 0
    %20 = vperm.xlu0 %19, %v12
    %v21 = vpop.permute.xlu0 %20
    %v23 = vlaneseq
    %v24 = vshrl.u32 %v23, 7
    %v25 = vsub.s32 0, %v24
    %v26 = vrot.slane %v13, %v25
    %v27 = vmul.f32 %v21, %v26
    %v28 = vlaneseq
    %v29 = vshrl.u32 %v28, 7
    %v30 = vsub.s32 3, %v29
    %v31 = vrot.slane %v13, %v30
    %v32 = vadd.f32 %v31, %v27
    %33 = vset.pattern.permute.xlu0 1
    %34 = vperm.xlu0 %33, %v12
    %v35 = vpop.permute.xlu0 %34
    %v37 = vlaneseq
    %v38 = vshrl.u32 %v37, 7
    %v39 = vsub.s32 1, %v38
    %v40 = vrot.slane %v13, %v39
    %v41 = vmul.f32 %v35, %v40
    %v42 = vadd.f32 %v32, %v41
    %43 = vset.pattern.permute.xlu0 2
    %44 = vperm.xlu0 %43, %v12
    %v45 = vpop.permute.xlu0 %44
    %v47 = vlaneseq
    %v48 = vshrl.u32 %v47, 7
    %v49 = vsub.s32 2, %v48
    %v50 = vrot.slane %v13, %v49
    %v51 = vmul.f32 %v45, %v50
    %v52 = vadd.f32 %v42, %v51
    %v53 = vmax.f32 %v52, 0.0
    %v54 = vlaneseq
    %v55 = vshrl.u32 %v54, 7
    %v56 = vsub.s32 4, %v55
    %v57 = vrot.slane %v17, %v56
    %vm63 = vcmask 1043456
    %v64 = vrot.slane %v13, 4
    %v65 = vrot.slane %v14, 4
    %v66 = vsel %vm63, %v64, %v65
    %v67 = vrot.slane %v15, 4
    %v68 = vsel %vm63, %v65, %v67
    %v69 = vrot.slane %v16, 4
    %v70 = vsel %vm63, %v67, %v69
    %v71 = vrot.slane %v17, 4
    %v72 = vsel %vm63, %v69, %v71
    %vm77 = vcmask 261120
    %v79 = vsel %vm77, %v53, 0
    %81 = vmatprep.subr.mxu0 0.0
    %82 = vmatpush1.msra.mxu0 %v66
    %83 = vmatprep.subr.mxu0 0.0
    %84 = vmatpush1.msra.mxu0 %v68
    %85 = vmatprep.subr.mxu0 0.0
    %86 = vmatpush1.msra.mxu0 %v70
    %87 = vmatprep.subr.mxu0 0.0
    %88 = vmatpush1.msra.mxu0 %v72
    %89 = vmatprep.subr.mxu0 0.0
    %90 = vmatpush1.msra.mxu0 0.0
    %91 = vmatprep.subr.mxu0 0.0
    %92 = vmatpush1.msra.mxu0 0.0
    %93 = vmatprep.subr.mxu0 0.0
    %94 = vmatpush1.msra.mxu0 0.0
    %95 = vmatprep.subr.mxu0 0.0
    %96 = vmatpush1.msra.mxu0 0.0
    %97 = vmatprep.subr.mxu0 0.0
    %98 = vmatpush1.msra.mxu0 0.0
    %99 = vmatprep.subr.mxu0 0.0
    %100 = vmatpush1.msra.mxu0 0.0
    %101 = vmatprep.subr.mxu0 0.0
    %102 = vmatpush1.msra.mxu0 0.0
    %103 = vmatprep.subr.mxu0 0.0
    %104 = vmatpush1.msra.mxu0 0.0
    %105 = vmatprep.subr.mxu0 0.0
    %106 = vmatpush1.msra.mxu0 0.0
    %107 = vmatprep.subr.mxu0 0.0
    %108 = vmatpush1.msra.mxu0 0.0
    %109 = vmatprep.subr.mxu0 0.0
    %110 = vmatpush1.msra.mxu0 0.0
    %111 = vmatprep.subr.mxu0 0.0
    %112 = vmatpush1.msra.mxu0 0.0
    %113 = vmatprep.subr.mxu0 0.0
    %114 = vmatpush1.msra.mxu0 0.0
    %115 = vmatprep.subr.mxu0 0.0
    %116 = vmatpush1.msra.mxu0 0.0
    %117 = vmatprep.subr.mxu0 0.0
    %118 = vmatpush1.msra.mxu0 0.0
    %119 = vmatprep.subr.mxu0 0.0
    %120 = vmatpush1.msra.mxu0 0.0
    %121 = vmatprep.subr.mxu0 0.0
    %122 = vmatpush1.msra.mxu0 0.0
    %123 = vmatprep.subr.mxu0 0.0
    %124 = vmatpush1.msra.mxu0 0.0
    %125 = vmatprep.subr.mxu0 0.0
    %126 = vmatpush1.msra.mxu0 0.0
    %127 = vmatprep.subr.mxu0 0.0
    %128 = vmatpush1.msra.mxu0 0.0
    %129 = vmatprep.subr.mxu0 0.0
    %130 = vmatpush1.msra.mxu0 0.0
    %131 = vmatprep.subr.mxu0 0.0
    %132 = vmatpush1.msra.mxu0 0.0
    %133 = vmatprep.subr.mxu0 0.0
    %134 = vmatpush1.msra.mxu0 0.0
    %135 = vmatprep.subr.mxu0 0.0
    %136 = vmatpush1.msra.mxu0 0.0
    %137 = vmatprep.subr.mxu0 0.0
    %138 = vmatpush1.msra.mxu0 0.0
    %139 = vmatprep.subr.mxu0 0.0
    %140 = vmatpush1.msra.mxu0 0.0
    %141 = vmatprep.subr.mxu0 0.0
    %142 = vmatpush1.msra.mxu0 0.0
    %143 = vmatprep.subr.mxu0 0.0
    %144 = vmatpush1.msra.mxu0 0.0
    %145 = vmatprep.mubr.f32.mxu0 0.0
    %146 = vmatmul.mubr.f32.gmra.mrb[0].mxu0 %v79
    %v147 = vpop.f32.mrb[0].mxu0
    %v148 = vadd.f32 %v57, %v147
    %v149 = vpop.f32.mrb[0].mxu0
    %150 = vdwg.mxu0
    %151 = vst.msk [vmem:[#allocation2] sm:$0xff] %vm77, %v148
    // Predicated region
    $region10: #{tpu_custom_call.1} parent=1 // pred_check
      _
    $region11: #{tpu_custom_call.1} parent=1 // pred_check_branch
      %153 = sbr.rel (0) target = $region13
    $region12: #{tpu_custom_call.1} parent=1 // pred_region
      %s155 = ssub.s32 128, 128
      %156 = vsyncadd [#allocation3], %s155
      %s158 = sshll.u32 [#allocation2], 4
      %s159 = int_to_ptr.vmem [resolvable:$true] %s158
      %161 = dma.vmem_to_hbm [thread:$0]  %s159, 128, %s2, [#allocation3]
    $region13: #{tpu_custom_call.1} parent=1 // pred_fallthru
      _
    // Predicated region
    $region14: #{tpu_custom_call.1} parent=1 // pred_check
      _
    $region15: #{tpu_custom_call.1} parent=1 // pred_check_branch
      %163 = sbr.rel (0) target = $region17
    $region16: #{tpu_custom_call.1} parent=1 // pred_region
      %164 = dma.done [#allocation3], 128
    $region17: #{tpu_custom_call.1} parent=1 // pred_fallthru
      _
    %165 = vsyncpa [#allocation3], 1

</llo_original>
